<compile_context>
chip_gen: v5e
topology: v5e:2x2
jax: 0.10.0
libtpu: 0.0.40
codegen_flags: <defaults>
</compile_context>

<pallas_src>
import jax
import jax.numpy as jnp
from jax.experimental import pallas as pl
from jax.experimental.pallas import tpu as pltpu


def _gelu_f32(x):
    # tanh-approximate GELU in f32 (tanh -> EUP, rest -> VPU).
    # TODO(synk): PyTorch nn.GELU() defaults to the exact erf formulation; the
    # tanh approximation differs by < ~1e-3 absolute.
    c = 0.7978845608028654  # sqrt(2/pi)
    return 0.5 * x * (1.0 + jnp.tanh(c * (x + 0.044715 * x * x * x)))


def _mlp_kernel(x_ref, w1_ref, b1_ref, w2_ref, b2_ref, o_ref, acc_ref):
    # Grid: (row_tiles, hidden_chunks).  acc_ref: (tm, d_out) f32 accumulator.
    k = pl.program_id(1)

    @pl.when(k == 0)
    def _():
        acc_ref[...] = jnp.zeros_like(acc_ref)

    # fc1 chunk: native-dtype operands, f32 MXU accumulation.
    h = jnp.dot(x_ref[...], w1_ref[...], preferred_element_type=jnp.float32)
    h = _gelu_f32(h + b1_ref[...].astype(jnp.float32))
    # fc2 chunk: cast hidden back to the weight dtype (bf16 fast path), f32 acc.
    acc_ref[...] += jnp.dot(h.astype(w2_ref.dtype), w2_ref[...],
                            preferred_element_type=jnp.float32)

    @pl.when(k == pl.num_programs(1) - 1)
    def _():
        o_ref[...] = (acc_ref[...] + b2_ref[...].astype(jnp.float32)).astype(o_ref.dtype)


def _round_up(v, to):
    return (v + to - 1) // to * to


def _pad_to(a, axis, size):
    cur = a.shape[axis]
    if cur == size:
        return a
    widths = [(0, 0)] * a.ndim
    widths[axis] = (0, size - cur)
    return jnp.pad(a, widths)


def mlp_forward(x, w1, b1, w2, b2, *, block_rows=256,
                weight_vmem_budget=16 * 2**20):
    """x: (..., in_features) -> (..., out_features).

    w1: (in_features, hidden_features), b1: (hidden_features,)
    w2: (hidden_features, out_features), b2: (out_features,)
    (i.e. weights are the transpose of PyTorch nn.Linear.weight; store them in
    bf16 at parameter-build time for the full-rate MXU path).
    """
    *lead, d_in = x.shape
    d_hid = w1.shape[1]
    d_out = w2.shape[1]
    assert w1.shape == (d_in, d_hid)
    assert w2.shape == (d_hid, d_out)
    assert b1.shape == (d_hid,) and b2.shape == (d_out,)

    out_dtype = x.dtype
    m = 1
    for s in lead:
        m *= s
    x2 = x.reshape(m, d_in)

    # ---- Feature dims padded to multiples of 128 (lane-dense tiles/stores). ----
    # TODO(synk): in production, pre-pad/pre-transpose bf16 weights once at
    # parameter-build time instead of padding per call.
    d_in_p = _round_up(d_in, 128)
    d_out_p = _round_up(d_out, 128)
    d_hid_128 = _round_up(d_hid, 128)

    # ---- Hidden-dim tiling: VMEM-resident weights when they fit, else stream. ----
    w_itemsize = jnp.dtype(w1.dtype).itemsize
    if (d_in_p + d_out_p) * d_hid_128 * w_itemsize <= weight_vmem_budget:
        tk = d_hid_128                      # single chunk, single-buffered weights
    else:
        tk = 512                            # stream d_hid in 128-aligned chunks
        while tk > 128 and (d_in_p + d_out_p) * tk * w_itemsize * 2 > weight_vmem_budget:
            tk //= 2
    d_hid_p = _round_up(d_hid, tk)
    n_hid = d_hid_p // tk
    single_w = (n_hid == 1)

    # ---- Zero-pad operands (padded hidden cols give GELU(0)=0 -> no effect). ----
    x2 = _pad_to(x2, 1, d_in_p)
    w1 = _pad_to(_pad_to(w1, 0, d_in_p), 1, d_hid_p)
    w2 = _pad_to(_pad_to(w2, 0, d_hid_p), 1, d_out_p)
    b1_2 = _pad_to(b1, 0, d_hid_p).reshape(1, d_hid_p)
    b2_2 = _pad_to(b2, 0, d_out_p).reshape(1, d_out_p)

    # ---- Row tiling: >= 2 row tiles when m >= 16 so v7x's 2 TCs both get work. ----
    if m > 2 * block_rows:
        tm = block_rows
    elif m >= 16:
        tm = _round_up(-(-m // 2), 8)
    else:
        tm = m
    n_rows = pl.cdiv(m, tm)

    def wspec(shape, index_map):
        if single_w:
            return pl.BlockSpec(shape, index_map, pipeline_mode=pl.Buffered(1))
        return pl.BlockSpec(shape, index_map)

    in_specs = [
        pl.BlockSpec((tm, d_in_p), lambda i, k: (i, 0)),    # activations (row tiles)
        wspec((d_in_p, tk), lambda i, k: (0, k)),           # fc1 weight chunk
        wspec((1, tk), lambda i, k: (0, k)),                 # fc1 bias chunk
        wspec((tk, d_out_p), lambda i, k: (k, 0)),           # fc2 weight chunk
        pl.BlockSpec((1, d_out_p), lambda i, k: (0, 0),      # fc2 bias (resident)
                     pipeline_mode=pl.Buffered(1)),
    ]
    out_specs = pl.BlockSpec((tm, d_out_p), lambda i, k: (i, 0))

    # ---- Explicit scoped-VMEM limit from the actual footprint (with headroom). ----
    x_itemsize = jnp.dtype(x2.dtype).itemsize
    o_itemsize = jnp.dtype(out_dtype).itemsize
    w_bufs = 1 if single_w else 2
    est = ((d_in_p * tk + tk + tk * d_out_p) * w_itemsize * w_bufs
           + d_out_p * w_itemsize
           + tm * d_in_p * x_itemsize * 2
           + tm * d_out_p * o_itemsize * 2
           + tm * d_out_p * 4
           + tm * tk * 4)                   # in-kernel f32 hidden temp
    vmem_limit = int(min(100 * 2**20, max(32 * 2**20, est * 3 // 2 + (8 << 20))))

    cost = pl.CostEstimate(
        flops=2 * m * (d_in_p * d_hid_p + d_hid_p * d_out_p),
        transcendentals=m * d_hid_p,
        bytes_accessed=(m * d_in_p * x_itemsize
                        + (d_in_p * d_hid_p + d_hid_p * d_out_p + d_hid_p + d_out_p) * w_itemsize
                        + m * d_out_p * o_itemsize),
    )

    out = pl.pallas_call(
        _mlp_kernel,
        out_shape=jax.ShapeDtypeStruct((m, d_out_p), out_dtype),
        grid=(n_rows, n_hid),
        in_specs=in_specs,
        out_specs=out_specs,
        scratch_shapes=[pltpu.VMEM((tm, d_out_p), jnp.float32)],
        compiler_params=pltpu.CompilerParams(
            dimension_semantics=("parallel", "arbitrary"),
            vmem_limit_bytes=vmem_limit,
        ),
        cost_estimate=cost,
    )(x2, w1, b1_2, w2, b2_2)

    if d_out_p != d_out:
        out = out[:, :d_out]
    return out.reshape(*lead, d_out)


def _reference(x, w1, b1, w2, b2):
    h = _gelu_f32(jnp.dot(x, w1) + b1)
    return jnp.dot(h, w2) + b2


if __name__ == "__main__":
    key = jax.random.PRNGKey(0)
    k1, k2, k3, k4, k5 = jax.random.split(key, 5)

    B, S = 2, 8                         # batch, sequence length
    D_IN, D_HID, D_OUT = 128, 256, 128  # 128-aligned feature dims (lane-dense)

    x = jax.random.normal(k1, (B, S, D_IN), dtype=jnp.float32)
    # PyTorch nn.Linear default init: U(-1/sqrt(fan_in), 1/sqrt(fan_in)).
    lim1 = 1.0 / (D_IN ** 0.5)
    lim2 = 1.0 / (D_HID ** 0.5)
    w1 = jax.random.uniform(k2, (D_IN, D_HID), jnp.float32, -lim1, lim1)
    b1 = jax.random.uniform(k3, (D_HID,), jnp.float32, -lim1, lim1)
    w2 = jax.random.uniform(k4, (D_HID, D_OUT), jnp.float32, -lim2, lim2)
    b2 = jax.random.uniform(k5, (D_OUT,), jnp.float32, -lim2, lim2)

    # bf16 params/activations (native-rate MXU path); kernel accumulates in f32.
    xb, w1b, b1b, w2b, b2b = (a.astype(jnp.bfloat16) for a in (x, w1, b1, w2, b2))

    y = jax.jit(mlp_forward)(xb, w1b, b1b, w2b, b2b)
    y = jax.block_until_ready(y)

    y_ref = _reference(x, w1, b1, w2, b2)   # f32 reference
    assert y.shape == (B, S, D_OUT), y.shape
    assert y.dtype == jnp.bfloat16, y.dtype
    err = float(jnp.max(jnp.abs(y.astype(jnp.float32) - y_ref)))
    assert err < 1e-1, f"max abs err {err}"

    print("KERNEL_OK")
</pallas_src>

<mosaic_0001>
module attributes {stable_mosaic.version = 11 : i64} {
  func.func @_mlp_kernel(%arg0: i32, %arg1: i32, %arg2: memref<8x128xbf16, #tpu.memory_space<vmem>>, %arg3: memref<128x256xbf16, #tpu.memory_space<vmem>>, %arg4: memref<1x256xbf16, #tpu.memory_space<vmem>>, %arg5: memref<256x128xbf16, #tpu.memory_space<vmem>>, %arg6: memref<1x128xbf16, #tpu.memory_space<vmem>>, %arg7: memref<8x128xbf16, #tpu.memory_space<vmem>>, %arg8: memref<8x128xf32, #tpu.memory_space<vmem>>) attributes {dimension_semantics = [#tpu.dimension_semantics<parallel>, #tpu.dimension_semantics<arbitrary>], iteration_bounds = array<i64: 2, 1>, scalar_prefetch = 0 : i64, scratch_operands = 1 : i64, tpu.core_type = #tpu.core_type<tc>, window_params = [{transform_indices = @transform_0, window_bounds = array<i64: 8, 128>}, {pipeline_mode = #tpu.pipeline_mode<synchronous>, transform_indices = @transform_1, window_bounds = array<i64: 128, 256>}, {pipeline_mode = #tpu.pipeline_mode<synchronous>, transform_indices = @transform_2, window_bounds = array<i64: 1, 256>}, {pipeline_mode = #tpu.pipeline_mode<synchronous>, transform_indices = @transform_3, window_bounds = array<i64: 256, 128>}, {pipeline_mode = #tpu.pipeline_mode<synchronous>, transform_indices = @transform_4, window_bounds = array<i64: 1, 128>}, {transform_indices = @transform_5, window_bounds = array<i64: 8, 128>}]} {
    %c0_i32 = arith.constant 0 : i32
    %0 = arith.cmpi eq, %arg1, %c0_i32 : i32
    %1 = arith.extui %0 : i1 to i32
    %c0_i32_0 = arith.constant 0 : i32
    %2 = arith.cmpi ne, %1, %c0_i32_0 : i32
    scf.if %2 {
      %cst_19 = arith.constant 0.000000e+00 : f32
      %32 = vector.broadcast %cst_19 : f32 to vector<8x128xf32>
      %c0_20 = arith.constant 0 : index
      %c0_21 = arith.constant 0 : index
      %33 = vector.load %arg8[%c0_20, %c0_21] : memref<8x128xf32, #tpu.memory_space<vmem>>, vector<8x128xf32>
      tpu.vector_store %arg8[%c0_20, %c0_21], %32 {strides = array<i32>} : memref<8x128xf32, #tpu.memory_space<vmem>>, vector<8x128xf32>,
    } else {
    }
    %c0 = arith.constant 0 : index
    %c0_1 = arith.constant 0 : index
    %3 = vector.load %arg2[%c0, %c0_1] : memref<8x128xbf16, #tpu.memory_space<vmem>>, vector<8x128xbf16>
    %c0_2 = arith.constant 0 : index
    %c0_3 = arith.constant 0 : index
    %4 = vector.load %arg3[%c0_2, %c0_3] : memref<128x256xbf16, #tpu.memory_space<vmem>>, vector<128x256xbf16>
    %cst = arith.constant dense<0.000000e+00> : vector<8x256xf32>
    %5 = tpu.matmul %3, %4, %cst {dimension_numbers = #tpu.dot_dimension_numbers<[1], [0], [0], [1], [0, 0, 1, 1], [], []>} : vector<8x128xbf16>, vector<128x256xbf16>, vector<8x256xf32> -> vector<8x256xf32>
    %c0_4 = arith.constant 0 : index
    %c0_5 = arith.constant 0 : index
    %6 = vector.load %arg4[%c0_4, %c0_5] : memref<1x256xbf16, #tpu.memory_space<vmem>>, vector<1x256xbf16>
    %7 = arith.extf %6 : vector<1x256xbf16> to vector<1x256xf32>
    %8 = vector.broadcast %7 : vector<1x256xf32> to vector<8x256xf32>
    %9 = arith.addf %5, %8 : vector<8x256xf32>
    %cst_6 = arith.constant 5.000000e-01 : f32
    %10 = vector.broadcast %cst_6 : f32 to vector<8x256xf32>
    %11 = arith.mulf %10, %9 : vector<8x256xf32>
    %cst_7 = arith.constant 4.471500e-02 : f32
    %12 = vector.broadcast %cst_7 : f32 to vector<8x256xf32>
    %13 = arith.mulf %12, %9 : vector<8x256xf32>
    %14 = arith.mulf %13, %9 : vector<8x256xf32>
    %15 = arith.mulf %14, %9 : vector<8x256xf32>
    %16 = arith.addf %9, %15 : vector<8x256xf32>
    %cst_8 = arith.constant 0.797884583 : f32
    %17 = vector.broadcast %cst_8 : f32 to vector<8x256xf32>
    %18 = arith.mulf %17, %16 : vector<8x256xf32>
    %19 = math.tanh %18 : vector<8x256xf32>
    %cst_9 = arith.constant 1.000000e+00 : f32
    %20 = vector.broadcast %cst_9 : f32 to vector<8x256xf32>
    %21 = arith.addf %20, %19 : vector<8x256xf32>
    %22 = arith.mulf %11, %21 : vector<8x256xf32>
    %c0_10 = arith.constant 0 : index
    %c0_11 = arith.constant 0 : index
    %23 = vector.load %arg8[%c0_10, %c0_11] : memref<8x128xf32, #tpu.memory_space<vmem>>, vector<8x128xf32>
    %24 = arith.truncf %22 : vector<8x256xf32> to vector<8x256xbf16>
    %c0_12 = arith.constant 0 : index
    %c0_13 = arith.constant 0 : index
    %25 = vector.load %arg5[%c0_12, %c0_13] : memref<256x128xbf16, #tpu.memory_space<vmem>>, vector<256x128xbf16>
    %cst_14 = arith.constant dense<0.000000e+00> : vector<8x128xf32>
    %26 = tpu.matmul %24, %25, %cst_14 {dimension_numbers = #tpu.dot_dimension_numbers<[1], [0], [0], [1], [0, 0, 1, 1], [], []>} : vector<8x256xbf16>, vector<256x128xbf16>, vector<8x128xf32> -> vector<8x128xf32>
    %27 = arith.addf %23, %26 : vector<8x128xf32>
    %c0_15 = arith.constant 0 : index
    %c0_16 = arith.constant 0 : index
    %28 = vector.load %arg8[%c0_15, %c0_16] : memref<8x128xf32, #tpu.memory_space<vmem>>, vector<8x128xf32>
    tpu.vector_store %arg8[%c0_15, %c0_16], %27 {strides = array<i32>} : memref<8x128xf32, #tpu.memory_space<vmem>>, vector<8x128xf32>,
    %c0_i32_17 = arith.constant 0 : i32
    %29 = arith.cmpi eq, %arg1, %c0_i32_17 : i32
    %30 = arith.extui %29 : i1 to i32
    %c0_i32_18 = arith.constant 0 : i32
    %31 = arith.cmpi ne, %30, %c0_i32_18 : i32
    scf.if %31 {
      %c0_19 = arith.constant 0 : index
      %c0_20 = arith.constant 0 : index
      %32 = vector.load %arg8[%c0_19, %c0_20] : memref<8x128xf32, #tpu.memory_space<vmem>>, vector<8x128xf32>
      %c0_21 = arith.constant 0 : index
      %c0_22 = arith.constant 0 : index
      %33 = vector.load %arg6[%c0_21, %c0_22] : memref<1x128xbf16, #tpu.memory_space<vmem>>, vector<1x128xbf16>
      %34 = arith.extf %33 : vector<1x128xbf16> to vector<1x128xf32>
      %35 = vector.broadcast %34 : vector<1x128xf32> to vector<8x128xf32>
      %36 = arith.addf %32, %35 : vector<8x128xf32>
      %37 = arith.truncf %36 : vector<8x128xf32> to vector<8x128xbf16>
      %c0_23 = arith.constant 0 : index
      %c0_24 = arith.constant 0 : index
      %38 = vector.load %arg7[%c0_23, %c0_24] : memref<8x128xbf16, #tpu.memory_space<vmem>>, vector<8x128xbf16>
      tpu.vector_store %arg7[%c0_23, %c0_24], %37 {strides = array<i32>} : memref<8x128xbf16, #tpu.memory_space<vmem>>, vector<8x128xbf16>,
    } else {
    }
    return
  }
  func.func @transform_0(%arg0: i32, %arg1: i32) -> (i32, i32) {
    %c0_i32 = arith.constant 0 : i32
    %c0_i32_0 = arith.constant 0 : i32
    return %arg0, %c0_i32 : i32, i32
  }
  func.func @transform_1(%arg0: i32, %arg1: i32) -> (i32, i32) {
    %c0_i32 = arith.constant 0 : i32
    %c0_i32_0 = arith.constant 0 : i32
    return %c0_i32, %arg1 : i32, i32
  }
  func.func @transform_2(%arg0: i32, %arg1: i32) -> (i32, i32) {
    %c0_i32 = arith.constant 0 : i32
    %c0_i32_0 = arith.constant 0 : i32
    return %c0_i32, %arg1 : i32, i32
  }
  func.func @transform_3(%arg0: i32, %arg1: i32) -> (i32, i32) {
    %c0_i32 = arith.constant 0 : i32
    %c0_i32_0 = arith.constant 0 : i32
    return %arg1, %c0_i32 : i32, i32
  }
  func.func @transform_4(%arg0: i32, %arg1: i32) -> (i32, i32) {
    %c0_i32 = arith.constant 0 : i32
    %c0_i32_0 = arith.constant 0 : i32
    %c0_i32_1 = arith.constant 0 : i32
    return %c0_i32, %c0_i32_0 : i32, i32
  }
  func.func @transform_5(%arg0: i32, %arg1: i32) -> (i32, i32) {
    %c0_i32 = arith.constant 0 : i32
    %c0_i32_0 = arith.constant 0 : i32
    return %arg0, %c0_i32 : i32, i32
  }
}

</mosaic_0001>

<llo_original>
// kernel: mlp_forward.1
$region0: #{mlp_forward.1}
  #allocation0 [shape = 'u32[]', space=smem, size = 0x4, offset = 0x4, fixed_abs, tag = 'smem constant byte address 0x4 - core index']
  #allocation1 [shape = 'u32[72,128]{1,0:T(1,128)}', space=vmem, size = 0x9000, scoped, tag = 'internal scratch']
  #allocation2 [shape = 'f32[8,128]{1,0:T(8,128)}', space=vmem, size = 0x1000, scoped, tag = 'scratch operand']
  %s0 = inlined_call_operand.hbm [shape: bf16[16,128], index: 0, kind: input, shape index: {}]
  %s1 = inlined_call_operand.hbm [shape: bf16[128,256], index: 1, kind: input, shape index: {}]
  %s2 = inlined_call_operand.vmem [shape: bf16[1,256], index: 2, kind: input, shape index: {}]
  %s3 = inlined_call_operand.hbm [shape: bf16[256,128], index: 3, kind: input, shape index: {}]
  %s4 = inlined_call_operand.vmem [shape: bf16[1,128], index: 4, kind: input, shape index: {}]
  %s5 = inlined_call_operand.hbm [shape: bf16[16,128], index: 5, kind: output, shape index: {}]
  %s6 = sld [smem:[#allocation0]]
  $region73: #{mlp_forward.1} parent=0
    _
  %s8 = ssub.s32 1, %s6
  %s9 = scalar_select 0, %s8, %s6
  $region1: #{mlp_forward.1} parent=0
    #allocation3 [shape = 'u8[4096]{0}', space=vmem, size = 0x1000, scoped, tag = 'input window, operand 0']
    #allocation4 [shape = 's32[2]{0}', space=sflag, size = 0x8, scoped, tag = 'scoped memory for mlp_forward.1']
    #allocation5 [shape = 's32[2]{0}', space=sflag, size = 0x8, scoped, tag = 'scoped memory for mlp_forward.1']
    #allocation6 [shape = 'u8[65536]{0}', space=vmem, size = 0x10000, scoped, tag = 'input window, operand 1, single buffered']
    #allocation7 [shape = 's32[1]{0}', space=sflag, size = 0x4, scoped, tag = 'scoped memory for mlp_forward.1']
    #allocation8 [shape = 'u8[65536]{0}', space=vmem, size = 0x10000, scoped, tag = 'input window, operand 3, single buffered']
    #allocation9 [shape = 'u8[4096]{0}', space=vmem, size = 0x1000, scoped, tag = 'output window, operand 0']
    %10 = vsyncpa [#allocation4], 0
    %s11 = scalar_lea.sflag [#allocation4], 1
    %12 = vsyncpa %s11, 0
    %13 = vsyncpa [#allocation7], 0
    %14 = vsyncpa [#allocation5], 0
    %s15 = scalar_lea.sflag [#allocation5], 1
    %16 = vsyncpa %s15, 0
    loop: start=0, step=1, limit=4
    $region2: #{mlp_forward.1} parent=1 // loop_pre_header
      _
    $region3: #{mlp_forward.1} parent=1 // loop_header
      %s18 = sphi 0, %s22
      %p19 = scmp.ge.s32.totalorder %s18, 4
      %s25 = sphi 0, %s37
      %s26 = sphi 0, %s33
      %s27 = sphi 0, %s25
      %s28 = sphi 0, %s26
      %s29 = sphi 0, %s27
      %s30 = sphi 0, %s28
      %s40 = sphi 0, %s42
      %s43 = sphi 0, %s40
      %s44 = sphi 0, %s43
      %s60 = sphi 0, %s44
      %s66 = sphi 0, %s68
      %s69 = sphi 0, %s66
      %s70 = sphi 0, %s69
      %s86 = sphi 0, %s70
      %s92 = sphi 0, %s94
      %s95 = sphi 0, %s92
      %s96 = sphi 0, %s95
      %s112 = sphi 0, %s96
      %s118 = sphi 0, %s120
      %s121 = sphi 0, %s118
      %s122 = sphi 0, %s121
      %s138 = sphi 0, %s122
      %s142 = sphi 0, %s142
      %s144 = sphi 0, %s142
      %s145 = sphi 0, %s144
      %s159 = sphi 0, %s145
      %s165 = sphi 0, %s167
      %s168 = sphi 0, %s165
      %s169 = sphi 0, %s168
      %s185 = sphi 0, %s169
    $region4: #{mlp_forward.1} parent=1 // loop_header_branch
      %21 = sbr.rel (%p19) target = $region8
    $region5: #{mlp_forward.1} parent=1 // loop_body
      %s23 = ssub.s32 %s18, 1
      %s24 = ssub.s32 %s18, 2
      %s31 = sadd.s32 1, %s26
      %p32 = scmp.ge.s32.totalorder %s31, 1
      %s33 = scalar_select %p32, 0, %s31
      %s34 = sadd.s32 1, %s25
      %s35 = scalar_select %p32, %s34, %s25
      %p36 = scmp.ge.s32.totalorder %s35, 2
      %s37 = scalar_select %p36, 0, %s35
      %s38 = ssub.s32 %s25, %s37
      %p39 = scmp.eq.s32.totalorder %s38, 0
      %s41 = sadd.s32 %s40, 1
      %s42 = scalar_select %p39, %s40, %s41
      %p45 = pneg %p39
      %p46 = scmp.eq.s32.totalorder %s18, 1
      %p47 = por %p45, %p46
      %p48 = scmp.ne.s32.totalorder %s40, %s43
      %p49 = scmp.eq.s32.totalorder %s18, 0
      %p50 = por %p48, %p49
      %p51 = scmp.ne.s32.totalorder %s40, %s43
      %p52 = scmp.eq.s32.totalorder %s23, 1
      %p53 = por %p51, %p52
      %p54 = scmp.ne.s32.totalorder %s43, %s44
      %p55 = scmp.eq.s32.totalorder %s23, 0
      %p56 = por %p54, %p55
      %p57 = scmp.ne.s32.totalorder %s43, %s44
      %p58 = scmp.eq.s32.totalorder %s24, 1
      %p59 = por %p57, %p58
      %p61 = scmp.ne.s32.totalorder %s44, %s60
      %p62 = scmp.eq.s32.totalorder %s24, 0
      %p63 = por %p61, %p62
      %s64 = ssub.s32 %s26, %s33
      %p65 = scmp.eq.s32.totalorder %s64, 0
      %s67 = sadd.s32 %s66, 1
      %s68 = scalar_select %p65, %s66, %s67
      %p71 = pneg %p65
      %p72 = scmp.eq.s32.totalorder %s18, 1
      %p73 = por %p71, %p72
      %p74 = scmp.ne.s32.totalorder %s66, %s69
      %p75 = scmp.eq.s32.totalorder %s18, 0
      %p76 = por %p74, %p75
      %p77 = scmp.ne.s32.totalorder %s66, %s69
      %p78 = scmp.eq.s32.totalorder %s23, 1
      %p79 = por %p77, %p78
      %p80 = scmp.ne.s32.totalorder %s69, %s70
      %p81 = scmp.eq.s32.totalorder %s23, 0
      %p82 = por %p80, %p81
      %p83 = scmp.ne.s32.totalorder %s69, %s70
      %p84 = scmp.eq.s32.totalorder %s24, 1
      %p85 = por %p83, %p84
      %p87 = scmp.ne.s32.totalorder %s70, %s86
      %p88 = scmp.eq.s32.totalorder %s24, 0
      %p89 = por %p87, %p88
      %s90 = ssub.s32 %s26, %s33
      %p91 = scmp.eq.s32.totalorder %s90, 0
      %s93 = sadd.s32 %s92, 1
      %s94 = scalar_select %p91, %s92, %s93
      %p97 = pneg %p91
      %p98 = scmp.eq.s32.totalorder %s18, 1
      %p99 = por %p97, %p98
      %p100 = scmp.ne.s32.totalorder %s92, %s95
      %p101 = scmp.eq.s32.totalorder %s18, 0
      %p102 = por %p100, %p101
      %p103 = scmp.ne.s32.totalorder %s92, %s95
      %p104 = scmp.eq.s32.totalorder %s23, 1
      %p105 = por %p103, %p104
      %p106 = scmp.ne.s32.totalorder %s95, %s96
      %p107 = scmp.eq.s32.totalorder %s23, 0
      %p108 = por %p106, %p107
      %p109 = scmp.ne.s32.totalorder %s95, %s96
      %p110 = scmp.eq.s32.totalorder %s24, 1
      %p111 = por %p109, %p110
      %p113 = scmp.ne.s32.totalorder %s96, %s112
      %p114 = scmp.eq.s32.totalorder %s24, 0
      %p115 = por %p113, %p114
      %s116 = ssub.s32 %s26, %s33
      %p117 = scmp.eq.s32.totalorder %s116, 0
      %s119 = sadd.s32 %s118, 1
      %s120 = scalar_select %p117, %s118, %s119
      %p123 = pneg %p117
      %p124 = scmp.eq.s32.totalorder %s18, 1
      %p125 = por %p123, %p124
      %p126 = scmp.ne.s32.totalorder %s118, %s121
      %p127 = scmp.eq.s32.totalorder %s18, 0
      %p128 = por %p126, %p127
      %p129 = scmp.ne.s32.totalorder %s118, %s121
      %p130 = scmp.eq.s32.totalorder %s23, 1
      %p131 = por %p129, %p130
      %p132 = scmp.ne.s32.totalorder %s121, %s122
      %p133 = scmp.eq.s32.totalorder %s23, 0
      %p134 = por %p132, %p133
      %p135 = scmp.ne.s32.totalorder %s121, %s122
      %p136 = scmp.eq.s32.totalorder %s24, 1
      %p137 = por %p135, %p136
      %p139 = scmp.ne.s32.totalorder %s122, %s138
      %p140 = scmp.eq.s32.totalorder %s24, 0
      %p141 = por %p139, %p140
      %s143 = sadd.s32 %s142, 1
      %p146 = scmp.eq.s32.totalorder %s18, 1
      %p147 = scmp.ne.s32.totalorder %s142, %s144
      %p148 = scmp.eq.s32.totalorder %s18, 0
      %p149 = por %p147, %p148
      %p150 = scmp.ne.s32.totalorder %s142, %s144
      %p151 = scmp.eq.s32.totalorder %s23, 1
      %p152 = por %p150, %p151
      %p153 = scmp.ne.s32.totalorder %s144, %s145
      %p154 = scmp.eq.s32.totalorder %s23, 0
      %p155 = por %p153, %p154
      %p156 = scmp.ne.s32.totalorder %s144, %s145
      %p157 = scmp.eq.s32.totalorder %s24, 1
      %p158 = por %p156, %p157
      %p160 = scmp.ne.s32.totalorder %s145, %s159
      %p161 = scmp.eq.s32.totalorder %s24, 0
      %p162 = por %p160, %p161
      %s163 = ssub.s32 %s25, %s37
      %p164 = scmp.eq.s32.totalorder %s163, 0
      %s166 = sadd.s32 %s165, 1
      %s167 = scalar_select %p164, %s165, %s166
      %p170 = pneg %p164
      %p171 = scmp.eq.s32.totalorder %s18, 1
      %p172 = por %p170, %p171
      %p173 = scmp.ne.s32.totalorder %s165, %s168
      %p174 = scmp.eq.s32.totalorder %s18, 0
      %p175 = por %p173, %p174
      %p176 = scmp.ne.s32.totalorder %s165, %s168
      %p177 = scmp.eq.s32.totalorder %s23, 1
      %p178 = por %p176, %p177
      %p179 = scmp.ne.s32.totalorder %s168, %s169
      %p180 = scmp.eq.s32.totalorder %s23, 0
      %p181 = por %p179, %p180
      %p182 = scmp.ne.s32.totalorder %s168, %s169
      %p183 = scmp.eq.s32.totalorder %s24, 1
      %p184 = por %p182, %p183
      %p186 = scmp.ne.s32.totalorder %s169, %s185
      %p187 = scmp.eq.s32.totalorder %s24, 0
      %p188 = por %p186, %p187
      %p189 = scmp.le.s32.totalorder 1, %s18
      %p190 = scmp.lt.s32.totalorder %s18, 3
      %p191 = pnand %p189, %p190
      %p192 = pneg %p191
      // Predicated region
      $region9: #{mlp_forward.1} parent=5 // pred_check
        _
      $region10: #{mlp_forward.1} parent=5 // pred_check_branch
        %194 = sbr.rel (%p191) target = $region12
      $region11: #{mlp_forward.1} parent=5 // pred_region
        %s195 = ssub.s32 %s18, 1
        // Predicated region
        $region13: #{mlp_forward.1} parent=11 // pred_check
          %p196 = pneg %p82
        $region14: #{mlp_forward.1} parent=11 // pred_check_branch
          %198 = sbr.rel (%p196) target = $region16
        $region15: #{mlp_forward.1} parent=11 // pred_region
          %s199 = smul.u32 2, %s28
          %201 = vsyncadd [#allocation7], 0
          %s202 = smul.addr %s199, 4
          %s203 = scalar_lea.hbm %s1, %s202
          %s204 = sshll.u32 %s203, 4
          %s205 = int_to_ptr.hbm [resolvable:$true] %s204
          %s206 = sshll.u32 [#allocation6], 4
          %s207 = int_to_ptr.vmem [resolvable:$true] %s206
          %212 = dma.hbm_to_vmem [thread:$0]  %s205, 2048, %s207, [#allocation7], 128, 128, 8
        $region16: #{mlp_forward.1} parent=11 // pred_fallthru
          _
        // Predicated region
        $region17: #{mlp_forward.1} parent=11 // pred_check
          %p213 = pneg %p108
        $region18: #{mlp_forward.1} parent=11 // pred_check_branch
          %215 = sbr.rel (%p213) target = $region20
        $region19: #{mlp_forward.1} parent=11 // pred_region
          %s216 = smul.u32 2, %s28
          %p217 = scmp.lt.s32.totalorder %s216, 1
          %s218 = scalar_select %p217, %s216, 1
          %s219 = scalar_lea.vmem %s2, %s218
          %s220 = smul.u32 2, %s28
        $region20: #{mlp_forward.1} parent=11 // pred_fallthru
          _
        // Predicated region
        $region21: #{mlp_forward.1} parent=11 // pred_check
          %p221 = pneg %p134
        $region22: #{mlp_forward.1} parent=11 // pred_check_branch
          %223 = sbr.rel (%p221) target = $region24
        $region23: #{mlp_forward.1} parent=11 // pred_region
          %s224 = smul.u32 32, %s28
          %226 = vsyncadd [#allocation7], 0
          %s227 = smul.addr %s224, 4
          %s228 = scalar_lea.hbm %s3, %s227
          %s229 = sshll.u32 %s228, 4
          %s230 = int_to_ptr.hbm [resolvable:$true] %s229
          %s231 = sshll.u32 [#allocation8], 4
          %s232 = int_to_ptr.vmem [resolvable:$true] %s231
          %237 = dma.hbm_to_vmem [thread:$0]  %s230, 2048, %s232, [#allocation7], 64, 64, 4
        $region24: #{mlp_forward.1} parent=11 // pred_fallthru
          _
        // Predicated region
        $region25: #{mlp_forward.1} parent=11 // pred_check
          %p238 = pneg %p155
        $region26: #{mlp_forward.1} parent=11 // pred_check_branch
          %240 = sbr.rel (%p238) target = $region28
        $region27: #{mlp_forward.1} parent=11 // pred_region
          _
        $region28: #{mlp_forward.1} parent=11 // pred_fallthru
          _
      $region12: #{mlp_forward.1} parent=5 // pred_fallthru
        _
      %p241 = scmp.lt.s32.totalorder %s18, 2
      // Predicated region
      $region29: #{mlp_forward.1} parent=5 // pred_check
        %p242 = pneg %p241
      $region30: #{mlp_forward.1} parent=5 // pred_check_branch
        %244 = sbr.rel (%p242) target = $region32
      $region31: #{mlp_forward.1} parent=5 // pred_region
        // Predicated region
        $region33: #{mlp_forward.1} parent=31 // pred_check
          %p245 = pneg %p50
        $region34: #{mlp_forward.1} parent=31 // pred_check_branch
          %247 = sbr.rel (%p245) target = $region36
        $region35: #{mlp_forward.1} parent=31 // pred_region
          %s248 = sand.u32 %s40, 1
          %s249 = scalar_lea.sflag [#allocation4], %s248
          %s250 = sand.u32 %s40, 1
          %s251 = smul.addr %s250, 4
          %s252 = scalar_lea.vmem [#allocation3], %s251
          %254 = vsyncadd %s249, 0
          %s255 = smul.addr %s25, 4
          %s256 = scalar_lea.hbm %s0, %s255
          %s258 = sshll.u32 %s256, 4
          %s259 = int_to_ptr.hbm [resolvable:$true] %s258
          %s260 = sshll.u32 %s252, 4
          %s261 = int_to_ptr.vmem [resolvable:$true] %s260
          %263 = dma.hbm_to_vmem [thread:$0]  %s259, 64, %s261, %s249
        $region36: #{mlp_forward.1} parent=31 // pred_fallthru
          _
      $region32: #{mlp_forward.1} parent=5 // pred_fallthru
        _
      %p264 = scmp.le.s32.totalorder 1, %s18
      %p265 = scmp.lt.s32.totalorder %s18, 3
      %p266 = pnand %p264, %p265
      %p267 = pneg %p266
      // Predicated region
      $region37: #{mlp_forward.1} parent=5 // pred_check
        _
      $region38: #{mlp_forward.1} parent=5 // pred_check_branch
        %269 = sbr.rel (%p266) target = $region40
      $region39: #{mlp_forward.1} parent=5 // pred_region
        %s270 = ssub.s32 %s18, 1
        %s271 = sand.u32 %s43, 1
        %s272 = scalar_lea.sflag [#allocation4], %s271
        %s273 = sand.u32 %s43, 1
        %s274 = smul.addr %s273, 4
        %s275 = scalar_lea.vmem [#allocation3], %s274
        // Predicated region
        $region41: #{mlp_forward.1} parent=39 // pred_check
          %p276 = pneg %p56
        $region42: #{mlp_forward.1} parent=39 // pred_check_branch
          %278 = sbr.rel (%p276) target = $region44
        $region43: #{mlp_forward.1} parent=39 // pred_region
          %280 = dma.done %s272, 64
        $region44: #{mlp_forward.1} parent=39 // pred_fallthru
          _
        // Predicated region
        $region45: #{mlp_forward.1} parent=39 // pred_check
          %p281 = pneg %p82
        $region46: #{mlp_forward.1} parent=39 // pred_check_branch
          %283 = sbr.rel (%p281) target = $region48
        $region47: #{mlp_forward.1} parent=39 // pred_region
          %285 = dma.done [#allocation7], 2048
        $region48: #{mlp_forward.1} parent=39 // pred_fallthru
          _
        // Predicated region
        $region49: #{mlp_forward.1} parent=39 // pred_check
          %p286 = pneg %p134
        $region50: #{mlp_forward.1} parent=39 // pred_check_branch
          %288 = sbr.rel (%p286) target = $region52
        $region51: #{mlp_forward.1} parent=39 // pred_region
          %290 = dma.done [#allocation7], 2048
        $region52: #{mlp_forward.1} parent=39 // pred_fallthru
          _
        %s291 = sand.u32 %s43, 1
        %s292 = scalar_lea.sflag [#allocation4], %s291
        %s293 = sand.u32 %s43, 1
        %s294 = smul.addr %s293, 4
        %s295 = scalar_lea.vmem [#allocation3], %s294
        %p296 = pneg %p56
        %p297 = pneg %p53
        %p298 = pneg %p82
        %p299 = pneg %p79
        %s300 = smul.u32 2, %s28
        %p301 = scmp.lt.s32.totalorder %s300, 1
        %s302 = scalar_select %p301, %s300, 1
        %s303 = scalar_lea.vmem %s2, %s302
        %p304 = pneg %p108
        %p305 = pneg %p105
        %p306 = pneg %p134
        %p307 = pneg %p131
        %p308 = pneg %p155
        %p309 = pneg %p152
        %p310 = pneg %p181
        %p311 = pneg %p178
        %s312 = sand.u32 %s168, 1
        %s313 = scalar_lea.sflag [#allocation5], %s312
        %s314 = sand.u32 %s168, 1
        %s315 = smul.addr %s314, 4
        %s316 = scalar_lea.vmem [#allocation9], %s315
        %s317 = smul.u32 2, %s28
        %s318 = smul.u32 2, %s28
        %p319 = scmp.lt.s32.totalorder %s318, 1
        %s320 = scalar_select %p319, %s318, 1
        %s321 = scalar_lea.vmem %s2, %s320
        %s322 = smul.u32 2, %s28
        %s323 = smul.u32 32, %s28
        %p324 = scmp.eq.s32.totalorder %s28, 0
        // Predicated region
        $region53: #{mlp_forward.1} parent=39 // pred_check
          %p325 = pneg %p324
        $region54: #{mlp_forward.1} parent=39 // pred_check_branch
          %327 = sbr.rel (%p325) target = $region56
        $region55: #{mlp_forward.1} parent=39 // pred_region
          %328 = vst [vmem:[#allocation2] sm:$0xff] 0.0
        $region56: #{mlp_forward.1} parent=39 // pred_fallthru
          _
        %v329 = vld [vmem:[%s275] sm:$0xf]
        %v330 = vld [vmem:[#allocation6] sm:$0xff]
        %v331 = vld [vmem:[#allocation6 + $0x8] sm:$0xff]
        %v332 = vld [vmem:[#allocation6 + $0x10] sm:$0xff]
        %v333 = vld [vmem:[#allocation6 + $0x18] sm:$0xff]
        %v334 = vld [vmem:[#allocation6 + $0x20] sm:$0xff]
        %v335 = vld [vmem:[#allocation6 + $0x28] sm:$0xff]
        %v336 = vld [vmem:[#allocation6 + $0x30] sm:$0xff]
        %v337 = vld [vmem:[#allocation6 + $0x38] sm:$0xff]
        %v338 = vld [vmem:[#allocation6 + $0x40] sm:$0xff]
        %v339 = vld [vmem:[#allocation6 + $0x48] sm:$0xff]
        %v340 = vld [vmem:[#allocation6 + $0x50] sm:$0xff]
        %v341 = vld [vmem:[#allocation6 + $0x58] sm:$0xff]
        %v342 = vld [vmem:[#allocation6 + $0x60] sm:$0xff]
        %v343 = vld [vmem:[#allocation6 + $0x68] sm:$0xff]
        %v344 = vld [vmem:[#allocation6 + $0x70] sm:$0xff]
        %v345 = vld [vmem:[#allocation6 + $0x78] sm:$0xff]
        %v346 = vld [vmem:[%s321] sm:$0x3]
        %v347 = vunpack.c.l.bf16 %v346
        %v349 = vperm.slane %v347, 0
        %v350 = vperm.slane %v347, 2
        %v353 = vperm.slane %v349, 0
        %v354 = vperm.slane %v350, 0
        %v371 = vunpack.c.l.b16 %v330
        %v372 = vunpack.c.h.b16 %v330
        %v373 = vunpack.c.l.b16 %v331
        %v374 = vunpack.c.h.b16 %v331
        %v375 = vunpack.c.l.b16 %v332
        %v376 = vunpack.c.h.b16 %v332
        %v377 = vunpack.c.l.b16 %v333
        %v378 = vunpack.c.h.b16 %v333
        %v379 = vunpack.c.l.b16 %v334
        %v380 = vunpack.c.h.b16 %v334
        %v381 = vunpack.c.l.b16 %v335
        %v382 = vunpack.c.h.b16 %v335
        %v383 = vunpack.c.l.b16 %v336
        %v384 = vunpack.c.h.b16 %v336
        %v385 = vunpack.c.l.b16 %v337
        %v386 = vunpack.c.h.b16 %v337
        %v387 = vunpack.c.l.b16 %v338
        %v388 = vunpack.c.h.b16 %v338
        %v389 = vunpack.c.l.b16 %v339
        %v390 = vunpack.c.h.b16 %v339
        %v391 = vunpack.c.l.b16 %v340
        %v392 = vunpack.c.h.b16 %v340
        %v393 = vunpack.c.l.b16 %v341
        %v394 = vunpack.c.h.b16 %v341
        %v395 = vunpack.c.l.b16 %v342
        %v396 = vunpack.c.h.b16 %v342
        %v397 = vunpack.c.l.b16 %v343
        %v398 = vunpack.c.h.b16 %v343
        %v399 = vunpack.c.l.b16 %v344
        %v400 = vunpack.c.h.b16 %v344
        %v401 = vunpack.c.l.b16 %v345
        %v402 = vunpack.c.h.b16 %v345
        %v403 = vpack.c.b16 %v373, %v371
        %v404 = vpack.c.b16 %v374, %v372
        %v405 = vpack.c.b16 %v377, %v375
        %v406 = vpack.c.b16 %v378, %v376
        %v407 = vpack.c.b16 %v381, %v379
        %v408 = vpack.c.b16 %v382, %v380
        %v409 = vpack.c.b16 %v385, %v383
        %v410 = vpack.c.b16 %v386, %v384
        %v411 = vpack.c.b16 %v389, %v387
        %v412 = vpack.c.b16 %v390, %v388
        %v413 = vpack.c.b16 %v393, %v391
        %v414 = vpack.c.b16 %v394, %v392
        %v415 = vpack.c.b16 %v397, %v395
        %v416 = vpack.c.b16 %v398, %v396
        %v417 = vpack.c.b16 %v401, %v399
        %v418 = vpack.c.b16 %v402, %v400
        %435 = vmatpush.bf16.msra.mxu0 %v417
        %436 = vmatpush.bf16.msra.mxu0 %v415
        %437 = vmatpush.bf16.msra.mxu0 %v413
        %438 = vmatpush.bf16.msra.mxu0 %v411
        %439 = vmatpush.bf16.msra.mxu0 %v409
        %440 = vmatpush.bf16.msra.mxu0 %v407
        %441 = vmatpush.bf16.msra.mxu0 %v405
        %442 = vmatpush.bf16.msra.mxu0 %v403
        %443 = vmatmul.bf16.gmra.mxu0 %v329
        %v444 = vpop.f32.mrf.mxu0
        %v445 = vadd.f32 %v353, %v444
        %v446 = vpop.f32.mrf.mxu0
        %447 = vdwg.mxu0
        %448 = vmatpush.bf16.msra.mxu0 %v418
        %449 = vmatpush.bf16.msra.mxu0 %v416
        %450 = vmatpush.bf16.msra.mxu0 %v414
        %451 = vmatpush.bf16.msra.mxu0 %v412
        %452 = vmatpush.bf16.msra.mxu0 %v410
        %453 = vmatpush.bf16.msra.mxu0 %v408
        %454 = vmatpush.bf16.msra.mxu0 %v406
        %455 = vmatpush.bf16.msra.mxu0 %v404
        %456 = vmatmul.bf16.gmra.mxu0 %v329
        %v457 = vpop.f32.mrf.mxu0
        %v458 = vadd.f32 %v354, %v457
        %v459 = vpop.f32.mrf.mxu0
        %460 = vdwg.mxu0
        %v461 = vmul.f32 %v445, 0.5
        %v462 = vmul.f32 %v458, 0.5
        %v463 = vmul.f32 %v445, 0.044715
        %v464 = vmul.f32 %v458, 0.044715
        %v465 = vmul.f32 %v463, %v445
        %v466 = vmul.f32 %v464, %v458
        %v467 = vmul.f32 %v465, %v445
        %v468 = vmul.f32 %v466, %v458
        %v469 = vadd.f32 %v445, %v467
        %v470 = vadd.f32 %v458, %v468
        %v471 = vmul.f32 %v469, 0.7978846
        %v472 = vmul.f32 %v470, 0.7978846
        %v473 = vtanh.pop %v471
        %v474 = vtanh.pop %v472
        %v475 = vadd.f32 %v473, 1.0
        %v476 = vadd.f32 %v474, 1.0
        %v477 = vmul.f32 %v461, %v475
        %v478 = vmul.f32 %v462, %v476
        %v479 = vld [vmem:[#allocation2] sm:$0xff]
        %v480 = vpack.c.bf16 %v477, %v477
        %v481 = vpack.c.bf16 %v478, %v478
        %v482 = vld [vmem:[#allocation8] sm:$0xf]
        %v483 = vld [vmem:[#allocation8 + $0x4] sm:$0xf]
        %v484 = vld [vmem:[#allocation8 + $0x8] sm:$0xf]
        %v485 = vld [vmem:[#allocation8 + $0xc] sm:$0xf]
        %v486 = vld [vmem:[#allocation8 + $0x10] sm:$0xf]
        %v487 = vld [vmem:[#allocation8 + $0x14] sm:$0xf]
        %v488 = vld [vmem:[#allocation8 + $0x18] sm:$0xf]
        %v489 = vld [vmem:[#allocation8 + $0x1c] sm:$0xf]
        %v490 = vld [vmem:[#allocation8 + $0x20] sm:$0xf]
        %v491 = vld [vmem:[#allocation8 + $0x24] sm:$0xf]
        %v492 = vld [vmem:[#allocation8 + $0x28] sm:$0xf]
        %v493 = vld [vmem:[#allocation8 + $0x2c] sm:$0xf]
        %v494 = vld [vmem:[#allocation8 + $0x30] sm:$0xf]
        %v495 = vld [vmem:[#allocation8 + $0x34] sm:$0xf]
        %v496 = vld [vmem:[#allocation8 + $0x38] sm:$0xf]
        %v497 = vld [vmem:[#allocation8 + $0x3c] sm:$0xf]
        %v498 = vld [vmem:[#allocation8 + $0x40] sm:$0xf]
        %v499 = vld [vmem:[#allocation8 + $0x44] sm:$0xf]
        %v500 = vld [vmem:[#allocation8 + $0x48] sm:$0xf]
        %v501 = vld [vmem:[#allocation8 + $0x4c] sm:$0xf]
        %v502 = vld [vmem:[#allocation8 + $0x50] sm:$0xf]
        %v503 = vld [vmem:[#allocation8 + $0x54] sm:$0xf]
        %v504 = vld [vmem:[#allocation8 + $0x58] sm:$0xf]
        %v505 = vld [vmem:[#allocation8 + $0x5c] sm:$0xf]
        %v506 = vld [vmem:[#allocation8 + $0x60] sm:$0xf]
        %v507 = vld [vmem:[#allocation8 + $0x64] sm:$0xf]
        %v508 = vld [vmem:[#allocation8 + $0x68] sm:$0xf]
        %v509 = vld [vmem:[#allocation8 + $0x6c] sm:$0xf]
        %v510 = vld [vmem:[#allocation8 + $0x70] sm:$0xf]
        %v511 = vld [vmem:[#allocation8 + $0x74] sm:$0xf]
        %v512 = vld [vmem:[#allocation8 + $0x78] sm:$0xf]
        %v513 = vld [vmem:[#allocation8 + $0x7c] sm:$0xf]
        %v546 = vunpack.c.l.b16 %v482
        %v547 = vunpack.c.l.b16 %v483
        %v548 = vunpack.c.l.b16 %v484
        %v549 = vunpack.c.l.b16 %v485
        %v550 = vunpack.c.l.b16 %v486
        %v551 = vunpack.c.l.b16 %v487
        %v552 = vunpack.c.l.b16 %v488
        %v553 = vunpack.c.l.b16 %v489
        %v554 = vunpack.c.l.b16 %v490
        %v555 = vunpack.c.l.b16 %v491
        %v556 = vunpack.c.l.b16 %v492
        %v557 = vunpack.c.l.b16 %v493
        %v558 = vunpack.c.l.b16 %v494
        %v559 = vunpack.c.l.b16 %v495
        %v560 = vunpack.c.l.b16 %v496
        %v561 = vunpack.c.l.b16 %v497
        %v562 = vunpack.c.l.b16 %v498
        %v563 = vunpack.c.l.b16 %v499
        %v564 = vunpack.c.l.b16 %v500
        %v565 = vunpack.c.l.b16 %v501
        %v566 = vunpack.c.l.b16 %v502
        %v567 = vunpack.c.l.b16 %v503
        %v568 = vunpack.c.l.b16 %v504
        %v569 = vunpack.c.l.b16 %v505
        %v570 = vunpack.c.l.b16 %v506
        %v571 = vunpack.c.l.b16 %v507
        %v572 = vunpack.c.l.b16 %v508
        %v573 = vunpack.c.l.b16 %v509
        %v574 = vunpack.c.l.b16 %v510
        %v575 = vunpack.c.l.b16 %v511
        %v576 = vunpack.c.l.b16 %v512
        %v577 = vunpack.c.l.b16 %v513
        %v578 = vpack.c.b16 %v547, %v546
        %v579 = vpack.c.b16 %v549, %v548
        %v580 = vpack.c.b16 %v551, %v550
        %v581 = vpack.c.b16 %v553, %v552
        %v582 = vpack.c.b16 %v555, %v554
        %v583 = vpack.c.b16 %v557, %v556
        %v584 = vpack.c.b16 %v559, %v558
        %v585 = vpack.c.b16 %v561, %v560
        %v586 = vpack.c.b16 %v563, %v562
        %v587 = vpack.c.b16 %v565, %v564
        %v588 = vpack.c.b16 %v567, %v566
        %v589 = vpack.c.b16 %v569, %v568
        %v590 = vpack.c.b16 %v571, %v570
        %v591 = vpack.c.b16 %v573, %v572
        %v592 = vpack.c.b16 %v575, %v574
        %v593 = vpack.c.b16 %v577, %v576
        %610 = vmatpush.bf16.msra.mxu0 %v585
        %611 = vmatpush.bf16.msra.mxu0 %v584
        %612 = vmatpush.bf16.msra.mxu0 %v583
        %613 = vmatpush.bf16.msra.mxu0 %v582
        %614 = vmatpush.bf16.msra.mxu0 %v581
        %615 = vmatpush.bf16.msra.mxu0 %v580
        %616 = vmatpush.bf16.msra.mxu0 %v579
        %617 = vmatpush.bf16.msra.mxu0 %v578
        %618 = vmatmul.bf16.gmra.mxu0 %v480
        %v619 = vpop.f32.mrf.mxu0
        %v620 = vadd.f32 0.0, %v619
        %v621 = vpop.f32.mrf.mxu0
        %622 = vdwg.mxu0
        %623 = vmatpush.bf16.msra.mxu0 %v593
        %624 = vmatpush.bf16.msra.mxu0 %v592
        %625 = vmatpush.bf16.msra.mxu0 %v591
        %626 = vmatpush.bf16.msra.mxu0 %v590
        %627 = vmatpush.bf16.msra.mxu0 %v589
        %628 = vmatpush.bf16.msra.mxu0 %v588
        %629 = vmatpush.bf16.msra.mxu0 %v587
        %630 = vmatpush.bf16.msra.mxu0 %v586
        %631 = vmatmul.bf16.gmra.mxu0 %v481
        %v632 = vpop.f32.mrf.mxu0
        %v633 = vadd.f32 %v620, %v632
        %v634 = vpop.f32.mrf.mxu0
        %635 = vdwg.mxu0
        %v636 = vadd.f32 %v479, %v633
        %637 = vst [vmem:[#allocation2] sm:$0xff] %v636
        // Predicated region
        $region57: #{mlp_forward.1} parent=39 // pred_check
          %p638 = pneg %p324
        $region58: #{mlp_forward.1} parent=39 // pred_check_branch
          %640 = sbr.rel (%p638) target = $region60
        $region59: #{mlp_forward.1} parent=39 // pred_region
          %v641 = vld [vmem:[#allocation2] sm:$0xff]
          %v642 = vld [vmem:[%s4] sm:$0x1]
          %v643 = vunpack.c.l.bf16 %v642
          %v644 = vperm.slane %v643, 0
          %v645 = vadd.f32 %v641, %v644
          %v646 = vpack.c.bf16 %v645, %v645
          %647 = vst [vmem:[%s316] sm:$0xf] %v646
        $region60: #{mlp_forward.1} parent=39 // pred_fallthru
          _
        %s648 = sand.u32 %s168, 1
        %s649 = scalar_lea.sflag [#allocation5], %s648
        %s650 = sand.u32 %s168, 1
        %s651 = smul.addr %s650, 4
        %s652 = scalar_lea.vmem [#allocation9], %s651
        // Predicated region
        $region61: #{mlp_forward.1} parent=39 // pred_check
          %p653 = pneg %p178
        $region62: #{mlp_forward.1} parent=39 // pred_check_branch
          %655 = sbr.rel (%p653) target = $region64
        $region63: #{mlp_forward.1} parent=39 // pred_region
          %657 = vsyncadd %s649, 0
          %s658 = smul.addr %s27, 4
          %s659 = scalar_lea.hbm %s5, %s658
          %s661 = sshll.u32 %s652, 4
          %s662 = int_to_ptr.vmem [resolvable:$true] %s661
          %s663 = sshll.u32 %s659, 4
          %s664 = int_to_ptr.hbm [resolvable:$true] %s663
          %666 = dma.vmem_to_hbm [thread:$0]  %s662, 64, %s664, %s649
        $region64: #{mlp_forward.1} parent=39 // pred_fallthru
          _
      $region40: #{mlp_forward.1} parent=5 // pred_fallthru
        _
      %p667 = scmp.le.s32.totalorder 2, %s18
      // Predicated region
      $region65: #{mlp_forward.1} parent=5 // pred_check
        %p668 = pneg %p667
      $region66: #{mlp_forward.1} parent=5 // pred_check_branch
        %670 = sbr.rel (%p668) target = $region68
      $region67: #{mlp_forward.1} parent=5 // pred_region
        %s671 = ssub.s32 %s18, 2
        // Predicated region
        $region69: #{mlp_forward.1} parent=67 // pred_check
          %p672 = pneg %p184
        $region70: #{mlp_forward.1} parent=67 // pred_check_branch
          %674 = sbr.rel (%p672) target = $region72
        $region71: #{mlp_forward.1} parent=67 // pred_region
          %s675 = sand.u32 %s169, 1
          %s676 = scalar_lea.sflag [#allocation5], %s675
          %s677 = sand.u32 %s169, 1
          %s678 = smul.addr %s677, 4
          %s679 = scalar_lea.vmem [#allocation9], %s678
          %681 = dma.done %s676, 64
        $region72: #{mlp_forward.1} parent=67 // pred_fallthru
          _
      $region68: #{mlp_forward.1} parent=5 // pred_fallthru
        _
    $region6: #{mlp_forward.1} parent=1 // loop_footer
      %s22 = sadd.s32 1, %s18
    $region7: #{mlp_forward.1} parent=1 // loop_footer_branch
      %17 = sbr.rel target = $region3
    $region8: #{mlp_forward.1} parent=1 // loop_exit
      _
    %682 = vsyncpa [#allocation4], 1
    %s683 = scalar_lea.sflag [#allocation4], 1
    %684 = vsyncpa %s683, 1
    %685 = vsyncpa [#allocation7], 1
    %686 = vsyncpa [#allocation5], 1
    %s687 = scalar_lea.sflag [#allocation5], 1
    %688 = vsyncpa %s687, 1

</llo_original>
